<compile_context>
chip_gen: v7x
topology: tpu7x:2x2x1
jax: 0.10.0
libtpu: 0.0.40
codegen_flags: <defaults>
</compile_context>

<pallas_src>
import jax
import jax.numpy as jnp
from jax.experimental import pallas as pl
from jax.experimental.pallas import tpu as pltpu


def _round_up(x, m):
    return ((x + m - 1) // m) * m


def _cdiv(a, b):
    return (a + b - 1) // b


def _physical_vmem_bytes():
    try:
        return int(pltpu.get_tpu_info().vmem_capacity_bytes)
    except Exception:
        return 64 * 1024 * 1024  # conservative default (v7x-sized)


def _mlp_kernel(x_ref, w1_ref, b1_ref, w2_ref, b2_ref, w3_ref, b3_ref, o_ref):
    # Layer 1: x @ W1 + b1, ReLU  (matmul-dtype operands, f32 accum/epilogue).
    h = jnp.dot(x_ref[...], w1_ref[...], preferred_element_type=jnp.float32)
    h = jnp.maximum(h + b1_ref[...], 0.0)
    # Layer 2: h @ W2 + b2, ReLU.
    h = jnp.dot(h.astype(w2_ref.dtype), w2_ref[...],
                preferred_element_type=jnp.float32)
    h = jnp.maximum(h + b2_ref[...], 0.0)
    # Output layer: h @ W3 + b3.
    z = jnp.dot(h.astype(w3_ref.dtype), w3_ref[...],
                preferred_element_type=jnp.float32)
    o_ref[...] = (z + b3_ref[...]).astype(o_ref.dtype)


def prepare_params(params, *, use_bf16=True):
    """Pad feature dims to 128 lanes and cast weights to the matmul dtype ONCE.

    Call this once (outside the step function) and reuse the result across
    forward calls; re-padding per call costs O(weights) extra HBM traffic.
    """
    w1, b1, w2, b2, w3, b3 = (params["w1"], params["b1"], params["w2"],
                              params["b2"], params["w3"], params["b3"])
    n_in, n_hidden = w1.shape
    n_out = w3.shape[1]
    n_h_p = _round_up(n_hidden, 128)
    n_out_p = _round_up(n_out, 128)
    mat_dtype = jnp.bfloat16 if use_bf16 else jnp.float32
    # n_in is NOT padded: x keeps its true feature width (block dim == full dim).
    w1p = jnp.zeros((n_in, n_h_p), mat_dtype).at[:, :n_hidden].set(w1.astype(mat_dtype))
    w2p = jnp.zeros((n_h_p, n_h_p), mat_dtype).at[:n_hidden, :n_hidden].set(w2.astype(mat_dtype))
    w3p = jnp.zeros((n_h_p, n_out_p), mat_dtype).at[:n_hidden, :n_out].set(w3.astype(mat_dtype))
    b1p = jnp.zeros((1, n_h_p), jnp.float32).at[:, :n_hidden].set(
        b1.reshape(1, -1).astype(jnp.float32))
    b2p = jnp.zeros((1, n_h_p), jnp.float32).at[:, :n_hidden].set(
        b2.reshape(1, -1).astype(jnp.float32))
    b3p = jnp.zeros((1, n_out_p), jnp.float32).at[:, :n_out].set(
        b3.reshape(1, -1).astype(jnp.float32))
    return {
        "w1p": w1p, "b1p": b1p, "w2p": w2p, "b2p": b2p, "w3p": w3p, "b3p": b3p,
        "n_in": n_in, "n_hidden": n_hidden, "n_out": n_out, "use_bf16": use_bf16,
    }


def _mlp_rows(x, prepared, *, tile_rows=None):
    """Fused 3-layer MLP on row-major input x: [R, n_in] -> [R, n_out]."""
    R, n_in = x.shape
    assert n_in == prepared["n_in"]
    n_out = prepared["n_out"]
    w1p, b1p = prepared["w1p"], prepared["b1p"]
    w2p, b2p = prepared["w2p"], prepared["b2p"]
    w3p, b3p = prepared["w3p"], prepared["b3p"]
    n_h_p = w2p.shape[0]
    n_out_p = w3p.shape[1]
    use_bf16 = prepared["use_bf16"]

    mat_dtype = jnp.bfloat16 if use_bf16 else jnp.float32
    out_dtype = jnp.bfloat16 if use_bf16 else jnp.float32  # bf16 halves writeback DMA
    itemsize = 2 if use_bf16 else 4
    out_itemsize = 2 if use_bf16 else 4
    sub = 16 if use_bf16 else 8  # sublane packing of the matmul dtype

    # Row tiling: choose TR from the step count so R_p - R stays small, and
    # guarantee >= 2 grid steps whenever R allows so both v7x TensorCores get
    # work (an extra step costs ~0.35 us on single-TC parts -> harmless).
    if tile_rows is None:
        tile_rows = 2048
    steps = max(1, _cdiv(R, tile_rows))
    if steps < 2 and R > sub:
        steps = 2
    TR = max(_round_up(_cdiv(R, steps), sub), sub)
    R_p = _round_up(R, TR)
    grid = R_p // TR

    # Only row-pad x (no 16x feature-padding inflation of the input in HBM).
    xc = x.astype(mat_dtype)
    xp = xc if R_p == R else jnp.zeros((R_p, n_in), mat_dtype).at[:R].set(xc)

    def run(single_buffer_weights):
        # Weights/biases have a constant index_map -> never re-fetched; single
        # buffering halves their resident VMEM.
        wmode = {"pipeline_mode": pl.Buffered(1)} if single_buffer_weights else {}
        wbuf = 1 if single_buffer_weights else 2

        weight_bytes = (n_in * n_h_p + n_h_p * n_h_p + n_h_p * n_out_p) * itemsize
        bias_bytes = (2 * n_h_p + n_out_p) * 4
        needed = (wbuf * (weight_bytes + bias_bytes)
                  + 2 * TR * n_in * itemsize          # double-buffered x tiles
                  + 2 * TR * n_out_p * out_itemsize   # double-buffered out tiles
                  + 2 * TR * n_h_p * 4                # f32 hidden activations
                  + (4 << 20))                        # headroom
        cap = (_physical_vmem_bytes() * 3) // 4       # ~48 MiB v7x, ~96 MiB v5e/v6e
        vmem_limit = int(min(max(needed, 32 * 1024 * 1024), cap))

        flops = 2 * R_p * (n_in * n_h_p + n_h_p * n_h_p + n_h_p * n_out_p)
        bytes_accessed = int(R_p * n_in * itemsize + weight_bytes + bias_bytes
                             + R_p * n_out_p * out_itemsize)

        return pl.pallas_call(
            _mlp_kernel,
            out_shape=jax.ShapeDtypeStruct((R_p, n_out_p), out_dtype),
            grid_spec=pltpu.PrefetchScalarGridSpec(
                num_scalar_prefetch=0,
                grid=(grid,),
                in_specs=[
                    pl.BlockSpec((TR, n_in), lambda i: (i, 0)),                # x rows
                    pl.BlockSpec((n_in, n_h_p), lambda i: (0, 0), **wmode),    # W1
                    pl.BlockSpec((1, n_h_p), lambda i: (0, 0), **wmode),       # b1
                    pl.BlockSpec((n_h_p, n_h_p), lambda i: (0, 0), **wmode),   # W2
                    pl.BlockSpec((1, n_h_p), lambda i: (0, 0), **wmode),       # b2
                    pl.BlockSpec((n_h_p, n_out_p), lambda i: (0, 0), **wmode), # W3
                    pl.BlockSpec((1, n_out_p), lambda i: (0, 0), **wmode),     # b3
                ],
                out_specs=pl.BlockSpec((TR, n_out_p), lambda i: (i, 0)),
            ),
            compiler_params=pltpu.CompilerParams(
                dimension_semantics=("parallel",),
                vmem_limit_bytes=vmem_limit,
            ),
            cost_estimate=pl.CostEstimate(
                flops=flops, transcendentals=0, bytes_accessed=bytes_accessed),
        )(xp, w1p, b1p, w2p, b2p, w3p, b3p)

    try:
        out = run(True)    # single-buffered resident weights
    except Exception:
        out = run(False)   # fallback if per-spec buffering is unavailable

    return out[:R, :n_out]


def generator_mlp_forward(latent, max_batch_len, mask, params, *,
                          tile_rows=None, use_bf16=True):
    """latent: [B, n_in], mask: [B, L] int.  Returns [B, L, n_out] = full_mask * mlp(generator(latent, L)).

    `params` may be raw MLP params (w1..b3) or the output of prepare_params()
    (preferred: prepare once, reuse across calls).
    """
    B, _ = latent.shape
    L = max_batch_len

    prepared = params if "w1p" in params else prepare_params(params, use_bf16=use_bf16)

    # Generator stand-in: position-independent broadcast of the latent along
    # the sequence axis -> run the MLP on just the B latent rows and broadcast
    # the (small) output instead of the (large) input.
    # TODO(synk): a real position-dependent generator must feed its flattened
    # [B*L, n_in] rows through _mlp_rows and reshape the result to [B, L, n_out].
    z_rows = _mlp_rows(latent, prepared, tile_rows=tile_rows)   # [B, n_out]
    z_rows = z_rows.astype(latent.dtype)

    # _get_full_mask semantics: rows [0, mask[i].sum()) of sample i are valid.
    valid_len = jnp.sum(mask, axis=-1)                          # [B]
    pos = jnp.arange(L, dtype=valid_len.dtype)[None, :]         # [1, L]
    row_mask = (pos < valid_len[:, None]).astype(z_rows.dtype)  # [B, L]

    return row_mask[:, :, None] * z_rows[:, None, :]            # [B, L, n_out]


def init_params(key, n_in, n_hidden, n_out):
    """Deterministic init for MLP(dim_in=n_in, width=n_hidden, dim_out=n_out, nb_layers=2)."""
    k1, k2, k3 = jax.random.split(key, 3)
    s1 = 1.0 / jnp.sqrt(n_in)
    s2 = 1.0 / jnp.sqrt(n_hidden)
    return {
        "w1": jax.random.uniform(k1, (n_in, n_hidden), jnp.float32, -s1, s1),
        "b1": jnp.zeros((1, n_hidden), jnp.float32),
        "w2": jax.random.uniform(k2, (n_hidden, n_hidden), jnp.float32, -s2, s2),
        "b2": jnp.zeros((1, n_hidden), jnp.float32),
        "w3": jax.random.uniform(k3, (n_hidden, n_out), jnp.float32, -s2, s2),
        "b3": jnp.zeros((1, n_out), jnp.float32),
    }


def _reference(latent, max_batch_len, mask, params):
    """Pure-JAX f32 reference matching the PyTorch forward semantics."""
    B, n_in = latent.shape
    L = max_batch_len
    x = jnp.broadcast_to(latent[:, None, :], (B, L, n_in))
    h = jnp.maximum(x @ params["w1"] + params["b1"], 0.0)
    h = jnp.maximum(h @ params["w2"] + params["b2"], 0.0)
    z = h @ params["w3"] + params["b3"]
    valid_len = jnp.sum(mask, axis=-1)
    row_mask = (jnp.arange(L)[None, :] < valid_len[:, None]).astype(z.dtype)
    return row_mask[:, :, None] * z


if __name__ == "__main__":
    key = jax.random.PRNGKey(0)
    k_lat, k_par = jax.random.split(key)

    # small shapes: batch=2, latent dim n_in=8, hidden=32, n_out=16, seq len L=8
    B, L, n_in, n_hidden, n_out = 2, 8, 8, 32, 16
    latent = jax.random.normal(k_lat, (B, n_in), jnp.float32)

    # per-sample validity masks (sample 0 has 5 valid rows, sample 1 has 7)
    mask = jnp.array(
        [[1, 1, 1, 1, 1, 0, 0, 0],
         [1, 1, 1, 1, 1, 1, 1, 0]], dtype=jnp.int32)

    params = init_params(k_par, n_in, n_hidden, n_out)
    ref = _reference(latent, L, mask, params)

    # Exact f32 kernel path (padded params prepared once, outside the call).
    prep_f32 = prepare_params(params, use_bf16=False)
    out_f32 = jax.block_until_ready(generator_mlp_forward(latent, L, mask, prep_f32))
    assert out_f32.shape == (B, L, n_out)
    assert jnp.allclose(out_f32, ref, atol=1e-5, rtol=1e-5)

    # Default fast path: bf16 MXU operands / bf16 writeback, f32 accumulation.
    prep_bf16 = prepare_params(params, use_bf16=True)
    out = jax.block_until_ready(generator_mlp_forward(latent, L, mask, prep_bf16))
    out2 = jax.block_until_ready(generator_mlp_forward(latent, L, mask, prep_bf16))
    assert out.shape == (B, L, n_out)
    assert jnp.allclose(out, ref, atol=3e-2, rtol=3e-2)
    assert jnp.allclose(out, out2)
    assert bool(jnp.all(out[0, 5:] == 0.0)) and bool(jnp.all(out[1, 7:] == 0.0))

    print("KERNEL_OK")
</pallas_src>

<mosaic_0001>
module attributes {stable_mosaic.version = 11 : i64} {
  func.func @_mlp_kernel(%arg0: i32, %arg1: memref<8x8xf32, #tpu.memory_space<vmem>>, %arg2: memref<8x128xf32, #tpu.memory_space<vmem>>, %arg3: memref<1x128xf32, #tpu.memory_space<vmem>>, %arg4: memref<128x128xf32, #tpu.memory_space<vmem>>, %arg5: memref<1x128xf32, #tpu.memory_space<vmem>>, %arg6: memref<128x128xf32, #tpu.memory_space<vmem>>, %arg7: memref<1x128xf32, #tpu.memory_space<vmem>>, %arg8: memref<8x128xf32, #tpu.memory_space<vmem>>) attributes {dimension_semantics = [#tpu.dimension_semantics<parallel>], iteration_bounds = array<i64: 1>, scalar_prefetch = 0 : i64, scratch_operands = 0 : i64, tpu.core_type = #tpu.core_type<tc>, window_params = [{transform_indices = @transform_0, window_bounds = array<i64: 8, 8>}, {pipeline_mode = #tpu.pipeline_mode<synchronous>, transform_indices = @transform_1, window_bounds = array<i64: 8, 128>}, {pipeline_mode = #tpu.pipeline_mode<synchronous>, transform_indices = @transform_2, window_bounds = array<i64: 1, 128>}, {pipeline_mode = #tpu.pipeline_mode<synchronous>, transform_indices = @transform_3, window_bounds = array<i64: 128, 128>}, {pipeline_mode = #tpu.pipeline_mode<synchronous>, transform_indices = @transform_4, window_bounds = array<i64: 1, 128>}, {pipeline_mode = #tpu.pipeline_mode<synchronous>, transform_indices = @transform_5, window_bounds = array<i64: 128, 128>}, {pipeline_mode = #tpu.pipeline_mode<synchronous>, transform_indices = @transform_6, window_bounds = array<i64: 1, 128>}, {transform_indices = @transform_7, window_bounds = array<i64: 8, 128>}]} {
    %c0 = arith.constant 0 : index
    %c0_0 = arith.constant 0 : index
    %0 = vector.load %arg1[%c0, %c0_0] : memref<8x8xf32, #tpu.memory_space<vmem>>, vector<8x8xf32>
    %c0_1 = arith.constant 0 : index
    %c0_2 = arith.constant 0 : index
    %1 = vector.load %arg2[%c0_1, %c0_2] : memref<8x128xf32, #tpu.memory_space<vmem>>, vector<8x128xf32>
    %cst = arith.constant dense<0.000000e+00> : vector<8x128xf32>
    %2 = tpu.matmul %0, %1, %cst {dimension_numbers = #tpu.dot_dimension_numbers<[1], [0], [0], [1], [0, 0, 1, 1], [], []>} : vector<8x8xf32>, vector<8x128xf32>, vector<8x128xf32> -> vector<8x128xf32>
    %c0_3 = arith.constant 0 : index
    %c0_4 = arith.constant 0 : index
    %3 = vector.load %arg3[%c0_3, %c0_4] : memref<1x128xf32, #tpu.memory_space<vmem>>, vector<1x128xf32>
    %4 = vector.broadcast %3 : vector<1x128xf32> to vector<8x128xf32>
    %5 = arith.addf %2, %4 : vector<8x128xf32>
    %cst_5 = arith.constant 0.000000e+00 : f32
    %6 = vector.broadcast %cst_5 : f32 to vector<8x128xf32>
    %7 = arith.maximumf %5, %6 : vector<8x128xf32>
    %c0_6 = arith.constant 0 : index
    %c0_7 = arith.constant 0 : index
    %8 = vector.load %arg4[%c0_6, %c0_7] : memref<128x128xf32, #tpu.memory_space<vmem>>, vector<128x128xf32>
    %cst_8 = arith.constant dense<0.000000e+00> : vector<8x128xf32>
    %9 = tpu.matmul %7, %8, %cst_8 {dimension_numbers = #tpu.dot_dimension_numbers<[1], [0], [0], [1], [0, 0, 1, 1], [], []>} : vector<8x128xf32>, vector<128x128xf32>, vector<8x128xf32> -> vector<8x128xf32>
    %c0_9 = arith.constant 0 : index
    %c0_10 = arith.constant 0 : index
    %10 = vector.load %arg5[%c0_9, %c0_10] : memref<1x128xf32, #tpu.memory_space<vmem>>, vector<1x128xf32>
    %11 = vector.broadcast %10 : vector<1x128xf32> to vector<8x128xf32>
    %12 = arith.addf %9, %11 : vector<8x128xf32>
    %cst_11 = arith.constant 0.000000e+00 : f32
    %13 = vector.broadcast %cst_11 : f32 to vector<8x128xf32>
    %14 = arith.maximumf %12, %13 : vector<8x128xf32>
    %c0_12 = arith.constant 0 : index
    %c0_13 = arith.constant 0 : index
    %15 = vector.load %arg6[%c0_12, %c0_13] : memref<128x128xf32, #tpu.memory_space<vmem>>, vector<128x128xf32>
    %cst_14 = arith.constant dense<0.000000e+00> : vector<8x128xf32>
    %16 = tpu.matmul %14, %15, %cst_14 {dimension_numbers = #tpu.dot_dimension_numbers<[1], [0], [0], [1], [0, 0, 1, 1], [], []>} : vector<8x128xf32>, vector<128x128xf32>, vector<8x128xf32> -> vector<8x128xf32>
    %c0_15 = arith.constant 0 : index
    %c0_16 = arith.constant 0 : index
    %17 = vector.load %arg7[%c0_15, %c0_16] : memref<1x128xf32, #tpu.memory_space<vmem>>, vector<1x128xf32>
    %18 = vector.broadcast %17 : vector<1x128xf32> to vector<8x128xf32>
    %19 = arith.addf %16, %18 : vector<8x128xf32>
    %c0_17 = arith.constant 0 : index
    %c0_18 = arith.constant 0 : index
    %20 = vector.load %arg8[%c0_17, %c0_18] : memref<8x128xf32, #tpu.memory_space<vmem>>, vector<8x128xf32>
    tpu.vector_store %arg8[%c0_17, %c0_18], %19 {strides = array<i32>} : memref<8x128xf32, #tpu.memory_space<vmem>>, vector<8x128xf32>,
    return
  }
  func.func @transform_0(%arg0: i32) -> (i32, i32) {
    %c0_i32 = arith.constant 0 : i32
    %c0_i32_0 = arith.constant 0 : i32
    return %arg0, %c0_i32 : i32, i32
  }
  func.func @transform_1(%arg0: i32) -> (i32, i32) {
    %c0_i32 = arith.constant 0 : i32
    %c0_i32_0 = arith.constant 0 : i32
    %c0_i32_1 = arith.constant 0 : i32
    return %c0_i32, %c0_i32_0 : i32, i32
  }
  func.func @transform_2(%arg0: i32) -> (i32, i32) {
    %c0_i32 = arith.constant 0 : i32
    %c0_i32_0 = arith.constant 0 : i32
    %c0_i32_1 = arith.constant 0 : i32
    return %c0_i32, %c0_i32_0 : i32, i32
  }
  func.func @transform_3(%arg0: i32) -> (i32, i32) {
    %c0_i32 = arith.constant 0 : i32
    %c0_i32_0 = arith.constant 0 : i32
    %c0_i32_1 = arith.constant 0 : i32
    return %c0_i32, %c0_i32_0 : i32, i32
  }
  func.func @transform_4(%arg0: i32) -> (i32, i32) {
    %c0_i32 = arith.constant 0 : i32
    %c0_i32_0 = arith.constant 0 : i32
    %c0_i32_1 = arith.constant 0 : i32
    return %c0_i32, %c0_i32_0 : i32, i32
  }
  func.func @transform_5(%arg0: i32) -> (i32, i32) {
    %c0_i32 = arith.constant 0 : i32
    %c0_i32_0 = arith.constant 0 : i32
    %c0_i32_1 = arith.constant 0 : i32
    return %c0_i32, %c0_i32_0 : i32, i32
  }
  func.func @transform_6(%arg0: i32) -> (i32, i32) {
    %c0_i32 = arith.constant 0 : i32
    %c0_i32_0 = arith.constant 0 : i32
    %c0_i32_1 = arith.constant 0 : i32
    return %c0_i32, %c0_i32_0 : i32, i32
  }
  func.func @transform_7(%arg0: i32) -> (i32, i32) {
    %c0_i32 = arith.constant 0 : i32
    %c0_i32_0 = arith.constant 0 : i32
    return %arg0, %c0_i32 : i32, i32
  }
}

module attributes {stable_mosaic.version = 11 : i64} {
  func.func @_mlp_kernel(%arg0: i32, %arg1: memref<8x8xf32, #tpu.memory_space<vmem>>, %arg2: memref<8x128xf32, #tpu.memory_space<vmem>>, %arg3: memref<1x128xf32, #tpu.memory_space<vmem>>, %arg4: memref<128x128xf32, #tpu.memory_space<vmem>>, %arg5: memref<1x128xf32, #tpu.memory_space<vmem>>, %arg6: memref<128x128xf32, #tpu.memory_space<vmem>>, %arg7: memref<1x128xf32, #tpu.memory_space<vmem>>, %arg8: memref<8x128xf32, #tpu.memory_space<vmem>>) attributes {dimension_semantics = [#tpu.dimension_semantics<parallel>], iteration_bounds = array<i64: 1>, scalar_prefetch = 0 : i64, scratch_operands = 0 : i64, tpu.core_type = #tpu.core_type<tc>, window_params = [{transform_indices = @transform_0, window_bounds = array<i64: 8, 8>}, {pipeline_mode = #tpu.pipeline_mode<synchronous>, transform_indices = @transform_1, window_bounds = array<i64: 8, 128>}, {pipeline_mode = #tpu.pipeline_mode<synchronous>, transform_indices = @transform_2, window_bounds = array<i64: 1, 128>}, {pipeline_mode = #tpu.pipeline_mode<synchronous>, transform_indices = @transform_3, window_bounds = array<i64: 128, 128>}, {pipeline_mode = #tpu.pipeline_mode<synchronous>, transform_indices = @transform_4, window_bounds = array<i64: 1, 128>}, {pipeline_mode = #tpu.pipeline_mode<synchronous>, transform_indices = @transform_5, window_bounds = array<i64: 128, 128>}, {pipeline_mode = #tpu.pipeline_mode<synchronous>, transform_indices = @transform_6, window_bounds = array<i64: 1, 128>}, {transform_indices = @transform_7, window_bounds = array<i64: 8, 128>}]} {
    %c0 = arith.constant 0 : index
    %c0_0 = arith.constant 0 : index
    %0 = vector.load %arg1[%c0, %c0_0] : memref<8x8xf32, #tpu.memory_space<vmem>>, vector<8x8xf32>
    %c0_1 = arith.constant 0 : index
    %c0_2 = arith.constant 0 : index
    %1 = vector.load %arg2[%c0_1, %c0_2] : memref<8x128xf32, #tpu.memory_space<vmem>>, vector<8x128xf32>
    %cst = arith.constant dense<0.000000e+00> : vector<8x128xf32>
    %2 = tpu.matmul %0, %1, %cst {dimension_numbers = #tpu.dot_dimension_numbers<[1], [0], [0], [1], [0, 0, 1, 1], [], []>} : vector<8x8xf32>, vector<8x128xf32>, vector<8x128xf32> -> vector<8x128xf32>
    %c0_3 = arith.constant 0 : index
    %c0_4 = arith.constant 0 : index
    %3 = vector.load %arg3[%c0_3, %c0_4] : memref<1x128xf32, #tpu.memory_space<vmem>>, vector<1x128xf32>
    %4 = vector.broadcast %3 : vector<1x128xf32> to vector<8x128xf32>
    %5 = arith.addf %2, %4 : vector<8x128xf32>
    %cst_5 = arith.constant 0.000000e+00 : f32
    %6 = vector.broadcast %cst_5 : f32 to vector<8x128xf32>
    %7 = arith.maximumf %5, %6 : vector<8x128xf32>
    %c0_6 = arith.constant 0 : index
    %c0_7 = arith.constant 0 : index
    %8 = vector.load %arg4[%c0_6, %c0_7] : memref<128x128xf32, #tpu.memory_space<vmem>>, vector<128x128xf32>
    %cst_8 = arith.constant dense<0.000000e+00> : vector<8x128xf32>
    %9 = tpu.matmul %7, %8, %cst_8 {dimension_numbers = #tpu.dot_dimension_numbers<[1], [0], [0], [1], [0, 0, 1, 1], [], []>} : vector<8x128xf32>, vector<128x128xf32>, vector<8x128xf32> -> vector<8x128xf32>
    %c0_9 = arith.constant 0 : index
    %c0_10 = arith.constant 0 : index
    %10 = vector.load %arg5[%c0_9, %c0_10] : memref<1x128xf32, #tpu.memory_space<vmem>>, vector<1x128xf32>
    %11 = vector.broadcast %10 : vector<1x128xf32> to vector<8x128xf32>
    %12 = arith.addf %9, %11 : vector<8x128xf32>
    %cst_11 = arith.constant 0.000000e+00 : f32
    %13 = vector.broadcast %cst_11 : f32 to vector<8x128xf32>
    %14 = arith.maximumf %12, %13 : vector<8x128xf32>
    %c0_12 = arith.constant 0 : index
    %c0_13 = arith.constant 0 : index
    %15 = vector.load %arg6[%c0_12, %c0_13] : memref<128x128xf32, #tpu.memory_space<vmem>>, vector<128x128xf32>
    %cst_14 = arith.constant dense<0.000000e+00> : vector<8x128xf32>
    %16 = tpu.matmul %14, %15, %cst_14 {dimension_numbers = #tpu.dot_dimension_numbers<[1], [0], [0], [1], [0, 0, 1, 1], [], []>} : vector<8x128xf32>, vector<128x128xf32>, vector<8x128xf32> -> vector<8x128xf32>
    %c0_15 = arith.constant 0 : index
    %c0_16 = arith.constant 0 : index
    %17 = vector.load %arg7[%c0_15, %c0_16] : memref<1x128xf32, #tpu.memory_space<vmem>>, vector<1x128xf32>
    %18 = vector.broadcast %17 : vector<1x128xf32> to vector<8x128xf32>
    %19 = arith.addf %16, %18 : vector<8x128xf32>
    %c0_17 = arith.constant 0 : index
    %c0_18 = arith.constant 0 : index
    %20 = vector.load %arg8[%c0_17, %c0_18] : memref<8x128xf32, #tpu.memory_space<vmem>>, vector<8x128xf32>
    tpu.vector_store %arg8[%c0_17, %c0_18], %19 {strides = array<i32>} : memref<8x128xf32, #tpu.memory_space<vmem>>, vector<8x128xf32>,
    return
  }
  func.func @transform_0(%arg0: i32) -> (i32, i32) {
    %c0_i32 = arith.constant 0 : i32
    %c0_i32_0 = arith.constant 0 : i32
    return %arg0, %c0_i32 : i32, i32
  }
  func.func @transform_1(%arg0: i32) -> (i32, i32) {
    %c0_i32 = arith.constant 0 : i32
    %c0_i32_0 = arith.constant 0 : i32
    %c0_i32_1 = arith.constant 0 : i32
    return %c0_i32, %c0_i32_0 : i32, i32
  }
  func.func @transform_2(%arg0: i32) -> (i32, i32) {
    %c0_i32 = arith.constant 0 : i32
    %c0_i32_0 = arith.constant 0 : i32
    %c0_i32_1 = arith.constant 0 : i32
    return %c0_i32, %c0_i32_0 : i32, i32
  }
  func.func @transform_3(%arg0: i32) -> (i32, i32) {
    %c0_i32 = arith.constant 0 : i32
    %c0_i32_0 = arith.constant 0 : i32
    %c0_i32_1 = arith.constant 0 : i32
    return %c0_i32, %c0_i32_0 : i32, i32
  }
  func.func @transform_4(%arg0: i32) -> (i32, i32) {
    %c0_i32 = arith.constant 0 : i32
    %c0_i32_0 = arith.constant 0 : i32
    %c0_i32_1 = arith.constant 0 : i32
    return %c0_i32, %c0_i32_0 : i32, i32
  }
  func.func @transform_5(%arg0: i32) -> (i32, i32) {
    %c0_i32 = arith.constant 0 : i32
    %c0_i32_0 = arith.constant 0 : i32
    %c0_i32_1 = arith.constant 0 : i32
    return %c0_i32, %c0_i32_0 : i32, i32
  }
  func.func @transform_6(%arg0: i32) -> (i32, i32) {
    %c0_i32 = arith.constant 0 : i32
    %c0_i32_0 = arith.constant 0 : i32
    %c0_i32_1 = arith.constant 0 : i32
    return %c0_i32, %c0_i32_0 : i32, i32
  }
  func.func @transform_7(%arg0: i32) -> (i32, i32) {
    %c0_i32 = arith.constant 0 : i32
    %c0_i32_0 = arith.constant 0 : i32
    return %arg0, %c0_i32 : i32, i32
  }
}

</mosaic_0001>

<llo_original>
// kernel: tpu_custom_call.1
$region0: #{tpu_custom_call.1}
  #allocation0 [shape = 'u32[]', space=smem, size = 0x4, offset = 0x4, fixed_abs, tag = 'smem constant byte address 0x4 - core index']
  #allocation1 [shape = 'u32[144,128]{1,0:T(1,128)}', space=vmem, size = 0x12000, scoped, tag = 'internal scratch']
  %s0 = inlined_call_operand.hbm [shape: f32[8,8], index: 0, kind: input, shape index: {}]
  %s1 = inlined_call_operand.hbm [shape: f32[8,128], index: 1, kind: input, shape index: {}]
  %s2 = inlined_call_operand.vmem [shape: f32[1,128], index: 2, kind: input, shape index: {}]
  %s3 = inlined_call_operand.hbm [shape: f32[128,128], index: 3, kind: input, shape index: {}]
  %s4 = inlined_call_operand.vmem [shape: f32[1,128], index: 4, kind: input, shape index: {}]
  %s5 = inlined_call_operand.hbm [shape: f32[128,128], index: 5, kind: input, shape index: {}]
  %s6 = inlined_call_operand.vmem [shape: f32[1,128], index: 6, kind: input, shape index: {}]
  %s7 = inlined_call_operand.hbm [shape: f32[8,128], index: 7, kind: output, shape index: {}]
  %s8 = sld [smem:[#allocation0]]
  $region54: #{tpu_custom_call.1} parent=0
    _
  %s10 = ssub.s32 1, %s8
  %s11 = scalar_select 0, %s10, %s8
  $region1: #{tpu_custom_call.1} parent=0
    #allocation2 [shape = 'u8[4096]{0}', space=vmem, size = 0x1000, scoped, tag = 'input window, operand 0, single buffered']
    #allocation3 [shape = 's32[1]{0}', space=sflag, size = 0x4, scoped, tag = 'scoped memory for tpu_custom_call.1']
    #allocation4 [shape = 's32[1]{0}', space=sflag, size = 0x4, scoped, tag = 'scoped memory for tpu_custom_call.1']
    #allocation5 [shape = 'u8[4096]{0}', space=vmem, size = 0x1000, scoped, tag = 'input window, operand 1, single buffered']
    #allocation6 [shape = 's32[1]{0}', space=sflag, size = 0x4, scoped, tag = 'scoped memory for tpu_custom_call.1']
    #allocation7 [shape = 'u8[65536]{0}', space=vmem, size = 0x10000, scoped, tag = 'input window, operand 3, single buffered']
    #allocation8 [shape = 'u8[65536]{0}', space=vmem, size = 0x10000, scoped, tag = 'input window, operand 5, single buffered']
    #allocation9 [shape = 's32[1]{0}', space=sflag, size = 0x4, scoped, tag = 'scoped memory for tpu_custom_call.1']
    #allocation10 [shape = 'u8[4096]{0}', space=vmem, size = 0x1000, scoped, tag = 'output window, operand 0, single buffered']
    %12 = vsyncpa [#allocation3], 0
    %13 = vsyncpa [#allocation6], 0
    %14 = vsyncpa [#allocation9], 0
    %15 = vsyncpa [#allocation4], 0
    // Predicated region
    $region2: #{tpu_custom_call.1} parent=1 // pred_check
      _
    $region3: #{tpu_custom_call.1} parent=1 // pred_check_branch
      %17 = sbr.rel (0) target = $region5
    $region4: #{tpu_custom_call.1} parent=1 // pred_region
      %s19 = ssub.s32 128, 128
      %20 = vsyncadd [#allocation3], %s19
      %s22 = sshll.u32 [#allocation2], 4
      %s23 = int_to_ptr.vmem [resolvable:$true] %s22
      %25 = dma.hbm_to_vmem [thread:$0]  %s0, 128, %s23, [#allocation3]
    $region5: #{tpu_custom_call.1} parent=1 // pred_fallthru
      _
    // Predicated region
    $region6: #{tpu_custom_call.1} parent=1 // pred_check
      _
    $region7: #{tpu_custom_call.1} parent=1 // pred_check_branch
      %27 = sbr.rel (0) target = $region9
    $region8: #{tpu_custom_call.1} parent=1 // pred_region
      %s29 = ssub.s32 128, 128
      %30 = vsyncadd [#allocation6], %s29
      %s32 = sshll.u32 [#allocation5], 4
      %s33 = int_to_ptr.vmem [resolvable:$true] %s32
      %35 = dma.hbm_to_vmem [thread:$0]  %s1, 128, %s33, [#allocation6]
    $region9: #{tpu_custom_call.1} parent=1 // pred_fallthru
      _
    // Predicated region
    $region10: #{tpu_custom_call.1} parent=1 // pred_check
      _
    $region11: #{tpu_custom_call.1} parent=1 // pred_check_branch
      %37 = sbr.rel (0) target = $region13
    $region12: #{tpu_custom_call.1} parent=1 // pred_region
      _
    $region13: #{tpu_custom_call.1} parent=1 // pred_fallthru
      _
    // Predicated region
    $region14: #{tpu_custom_call.1} parent=1 // pred_check
      _
    $region15: #{tpu_custom_call.1} parent=1 // pred_check_branch
      %39 = sbr.rel (0) target = $region17
    $region16: #{tpu_custom_call.1} parent=1 // pred_region
      %s41 = ssub.s32 2048, 2048
      %42 = vsyncadd [#allocation6], %s41
      %s43 = sshll.u32 [#allocation7], 4
      %s44 = int_to_ptr.vmem [resolvable:$true] %s43
      %49 = dma.hbm_to_vmem [thread:$0]  %s3, 2048, %s44, [#allocation6], 128, 128, 8
    $region17: #{tpu_custom_call.1} parent=1 // pred_fallthru
      _
    // Predicated region
    $region18: #{tpu_custom_call.1} parent=1 // pred_check
      _
    $region19: #{tpu_custom_call.1} parent=1 // pred_check_branch
      %51 = sbr.rel (0) target = $region21
    $region20: #{tpu_custom_call.1} parent=1 // pred_region
      _
    $region21: #{tpu_custom_call.1} parent=1 // pred_fallthru
      _
    // Predicated region
    $region22: #{tpu_custom_call.1} parent=1 // pred_check
      _
    $region23: #{tpu_custom_call.1} parent=1 // pred_check_branch
      %53 = sbr.rel (0) target = $region25
    $region24: #{tpu_custom_call.1} parent=1 // pred_region
      %s55 = ssub.s32 2048, 2048
      %56 = vsyncadd [#allocation9], %s55
      %s57 = sshll.u32 [#allocation8], 4
      %s58 = int_to_ptr.vmem [resolvable:$true] %s57
      %63 = dma.hbm_to_vmem [thread:$0]  %s5, 2048, %s58, [#allocation9], 128, 128, 8
    $region25: #{tpu_custom_call.1} parent=1 // pred_fallthru
      _
    // Predicated region
    $region26: #{tpu_custom_call.1} parent=1 // pred_check
      _
    $region27: #{tpu_custom_call.1} parent=1 // pred_check_branch
      %65 = sbr.rel (0) target = $region29
    $region28: #{tpu_custom_call.1} parent=1 // pred_region
      _
    $region29: #{tpu_custom_call.1} parent=1 // pred_fallthru
      _
    // Predicated region
    $region30: #{tpu_custom_call.1} parent=1 // pred_check
      _
    $region31: #{tpu_custom_call.1} parent=1 // pred_check_branch
      %67 = sbr.rel (0) target = $region33
    $region32: #{tpu_custom_call.1} parent=1 // pred_region
      %68 = dma.done [#allocation3], 128
    $region33: #{tpu_custom_call.1} parent=1 // pred_fallthru
      _
    // Predicated region
    $region34: #{tpu_custom_call.1} parent=1 // pred_check
      _
    $region35: #{tpu_custom_call.1} parent=1 // pred_check_branch
      %70 = sbr.rel (0) target = $region37
    $region36: #{tpu_custom_call.1} parent=1 // pred_region
      %71 = dma.done [#allocation6], 128
    $region37: #{tpu_custom_call.1} parent=1 // pred_fallthru
      _
    // Predicated region
    $region38: #{tpu_custom_call.1} parent=1 // pred_check
      _
    $region39: #{tpu_custom_call.1} parent=1 // pred_check_branch
      %73 = sbr.rel (0) target = $region41
    $region40: #{tpu_custom_call.1} parent=1 // pred_region
      %74 = dma.done [#allocation6], 2048
    $region41: #{tpu_custom_call.1} parent=1 // pred_fallthru
      _
    // Predicated region
    $region42: #{tpu_custom_call.1} parent=1 // pred_check
      _
    $region43: #{tpu_custom_call.1} parent=1 // pred_check_branch
      %76 = sbr.rel (0) target = $region45
    $region44: #{tpu_custom_call.1} parent=1 // pred_region
      %77 = dma.done [#allocation9], 2048
    $region45: #{tpu_custom_call.1} parent=1 // pred_fallthru
      _
    %v78 = vld [vmem:[#allocation2] sm:$0xff]
    %v79 = vld [vmem:[#allocation5] sm:$0xff]
    %v80 = vld [vmem:[%s2] sm:$0x1]
    %v82 = vlaneseq
    %v83 = vshrl.u32 %v82, 7
    %v84 = vsub.s32 0, %v83
    %v85 = vrot.slane %v80, %v84
    %vm87 = vcmask 64512
    %v89 = vsel %vm87, %v78, 0
    %91 = vmatprep.subr.mxu0 0.0
    %92 = vmatpush1.msra.mxu0 %v79
    %93 = vmatprep.subr.mxu0 0.0
    %94 = vmatpush1.msra.mxu0 0.0
    %95 = vmatprep.subr.mxu0 0.0
    %96 = vmatpush1.msra.mxu0 0.0
    %97 = vmatprep.subr.mxu0 0.0
    %98 = vmatpush1.msra.mxu0 0.0
    %99 = vmatprep.subr.mxu0 0.0
    %100 = vmatpush1.msra.mxu0 0.0
    %101 = vmatprep.subr.mxu0 0.0
    %102 = vmatpush1.msra.mxu0 0.0
    %103 = vmatprep.subr.mxu0 0.0
    %104 = vmatpush1.msra.mxu0 0.0
    %105 = vmatprep.subr.mxu0 0.0
    %106 = vmatpush1.msra.mxu0 0.0
    %107 = vmatprep.subr.mxu0 0.0
    %108 = vmatpush1.msra.mxu0 0.0
    %109 = vmatprep.subr.mxu0 0.0
    %110 = vmatpush1.msra.mxu0 0.0
    %111 = vmatprep.subr.mxu0 0.0
    %112 = vmatpush1.msra.mxu0 0.0
    %113 = vmatprep.subr.mxu0 0.0
    %114 = vmatpush1.msra.mxu0 0.0
    %115 = vmatprep.subr.mxu0 0.0
    %116 = vmatpush1.msra.mxu0 0.0
    %117 = vmatprep.subr.mxu0 0.0
    %118 = vmatpush1.msra.mxu0 0.0
    %119 = vmatprep.subr.mxu0 0.0
    %120 = vmatpush1.msra.mxu0 0.0
    %121 = vmatprep.subr.mxu0 0.0
    %122 = vmatpush1.msra.mxu0 0.0
    %123 = vmatprep.subr.mxu0 0.0
    %124 = vmatpush1.msra.mxu0 0.0
    %125 = vmatprep.subr.mxu0 0.0
    %126 = vmatpush1.msra.mxu0 0.0
    %127 = vmatprep.subr.mxu0 0.0
    %128 = vmatpush1.msra.mxu0 0.0
    %129 = vmatprep.subr.mxu0 0.0
    %130 = vmatpush1.msra.mxu0 0.0
    %131 = vmatprep.subr.mxu0 0.0
    %132 = vmatpush1.msra.mxu0 0.0
    %133 = vmatprep.subr.mxu0 0.0
    %134 = vmatpush1.msra.mxu0 0.0
    %135 = vmatprep.subr.mxu0 0.0
    %136 = vmatpush1.msra.mxu0 0.0
    %137 = vmatprep.subr.mxu0 0.0
    %138 = vmatpush1.msra.mxu0 0.0
    %139 = vmatprep.subr.mxu0 0.0
    %140 = vmatpush1.msra.mxu0 0.0
    %141 = vmatprep.subr.mxu0 0.0
    %142 = vmatpush1.msra.mxu0 0.0
    %143 = vmatprep.subr.mxu0 0.0
    %144 = vmatpush1.msra.mxu0 0.0
    %145 = vmatprep.subr.mxu0 0.0
    %146 = vmatpush1.msra.mxu0 0.0
    %147 = vmatprep.subr.mxu0 0.0
    %148 = vmatpush1.msra.mxu0 0.0
    %149 = vmatprep.subr.mxu0 0.0
    %150 = vmatpush1.msra.mxu0 0.0
    %151 = vmatprep.subr.mxu0 0.0
    %152 = vmatpush1.msra.mxu0 0.0
    %153 = vmatprep.subr.mxu0 0.0
    %154 = vmatpush1.msra.mxu0 0.0
    %155 = vmatprep.mubr.f32.mxu0 0.0
    %156 = vmatmul.mubr.f32.gmra.mrb[0].mxu0 %v89
    %v157 = vpop.f32.mrb[0].mxu0
    %v158 = vadd.f32 %v85, %v157
    %v159 = vpop.f32.mrb[0].mxu0
    %160 = vdwg.mxu0
    %v161 = vmax.f32 %v158, 0.0
    %v162 = vld [vmem:[#allocation7] sm:$0xff]
    %v163 = vld [vmem:[#allocation7 + $0x8] sm:$0xff]
    %v164 = vld [vmem:[#allocation7 + $0x10] sm:$0xff]
    %v165 = vld [vmem:[#allocation7 + $0x18] sm:$0xff]
    %v166 = vld [vmem:[#allocation7 + $0x20] sm:$0xff]
    %v167 = vld [vmem:[#allocation7 + $0x28] sm:$0xff]
    %v168 = vld [vmem:[#allocation7 + $0x30] sm:$0xff]
    %v169 = vld [vmem:[#allocation7 + $0x38] sm:$0xff]
    %v170 = vld [vmem:[#allocation7 + $0x40] sm:$0xff]
    %v171 = vld [vmem:[#allocation7 + $0x48] sm:$0xff]
    %v172 = vld [vmem:[#allocation7 + $0x50] sm:$0xff]
    %v173 = vld [vmem:[#allocation7 + $0x58] sm:$0xff]
    %v174 = vld [vmem:[#allocation7 + $0x60] sm:$0xff]
    %v175 = vld [vmem:[#allocation7 + $0x68] sm:$0xff]
    %v176 = vld [vmem:[#allocation7 + $0x70] sm:$0xff]
    %v177 = vld [vmem:[#allocation7 + $0x78] sm:$0xff]
    %v178 = vld [vmem:[%s4] sm:$0x1]
    %v180 = vlaneseq
    %v181 = vshrl.u32 %v180, 7
    %v182 = vsub.s32 0, %v181
    %v183 = vrot.slane %v178, %v182
    %185 = vmatprep.subr.mxu0 0.0
    %186 = vmatpush1.msra.mxu0 %v162
    %187 = vmatprep.subr.mxu0 0.0
    %188 = vmatpush1.msra.mxu0 %v163
    %189 = vmatprep.subr.mxu0 0.0
    %190 = vmatpush1.msra.mxu0 %v164
    %191 = vmatprep.subr.mxu0 0.0
    %192 = vmatpush1.msra.mxu0 %v165
    %193 = vmatprep.subr.mxu0 0.0
    %194 = vmatpush1.msra.mxu0 %v166
    %195 = vmatprep.subr.mxu0 0.0
    %196 = vmatpush1.msra.mxu0 %v167
    %197 = vmatprep.subr.mxu0 0.0
    %198 = vmatpush1.msra.mxu0 %v168
    %199 = vmatprep.subr.mxu0 0.0
    %200 = vmatpush1.msra.mxu0 %v169
    %201 = vmatprep.subr.mxu0 0.0
    %202 = vmatpush1.msra.mxu0 %v170
    %203 = vmatprep.subr.mxu0 0.0
    %204 = vmatpush1.msra.mxu0 %v171
    %205 = vmatprep.subr.mxu0 0.0
    %206 = vmatpush1.msra.mxu0 %v172
    %207 = vmatprep.subr.mxu0 0.0
    %208 = vmatpush1.msra.mxu0 %v173
    %209 = vmatprep.subr.mxu0 0.0
    %210 = vmatpush1.msra.mxu0 %v174
    %211 = vmatprep.subr.mxu0 0.0
    %212 = vmatpush1.msra.mxu0 %v175
    %213 = vmatprep.subr.mxu0 0.0
    %214 = vmatpush1.msra.mxu0 %v176
    %215 = vmatprep.subr.mxu0 0.0
    %216 = vmatpush1.msra.mxu0 %v177
    %217 = vmatprep.subr.mxu0 0.0
    %218 = vmatpush1.msra.mxu0 0.0
    %219 = vmatprep.subr.mxu0 0.0
    %220 = vmatpush1.msra.mxu0 0.0
    %221 = vmatprep.subr.mxu0 0.0
    %222 = vmatpush1.msra.mxu0 0.0
    %223 = vmatprep.subr.mxu0 0.0
    %224 = vmatpush1.msra.mxu0 0.0
    %225 = vmatprep.subr.mxu0 0.0
    %226 = vmatpush1.msra.mxu0 0.0
    %227 = vmatprep.subr.mxu0 0.0
    %228 = vmatpush1.msra.mxu0 0.0
    %229 = vmatprep.subr.mxu0 0.0
    %230 = vmatpush1.msra.mxu0 0.0
    %231 = vmatprep.subr.mxu0 0.0
    %232 = vmatpush1.msra.mxu0 0.0
    %233 = vmatprep.subr.mxu0 0.0
    %234 = vmatpush1.msra.mxu0 0.0
    %235 = vmatprep.subr.mxu0 0.0
    %236 = vmatpush1.msra.mxu0 0.0
    %237 = vmatprep.subr.mxu0 0.0
    %238 = vmatpush1.msra.mxu0 0.0
    %239 = vmatprep.subr.mxu0 0.0
    %240 = vmatpush1.msra.mxu0 0.0
    %241 = vmatprep.subr.mxu0 0.0
    %242 = vmatpush1.msra.mxu0 0.0
    %243 = vmatprep.subr.mxu0 0.0
    %244 = vmatpush1.msra.mxu0 0.0
    %245 = vmatprep.subr.mxu0 0.0
    %246 = vmatpush1.msra.mxu0 0.0
    %247 = vmatprep.subr.mxu0 0.0
    %248 = vmatpush1.msra.mxu0 0.0
    %249 = vmatprep.mubr.f32.mxu0 0.0
    %250 = vmatmul.mubr.f32.gmra.mrb[0].mxu0 %v161
    %v251 = vpop.f32.mrb[0].mxu0
    %v252 = vadd.f32 %v183, %v251
    %v253 = vpop.f32.mrb[0].mxu0
    %254 = vdwg.mxu0
    %v255 = vmax.f32 %v252, 0.0
    %v256 = vld [vmem:[#allocation8] sm:$0xff]
    %v257 = vld [vmem:[#allocation8 + $0x8] sm:$0xff]
    %v258 = vld [vmem:[#allocation8 + $0x10] sm:$0xff]
    %v259 = vld [vmem:[#allocation8 + $0x18] sm:$0xff]
    %v260 = vld [vmem:[#allocation8 + $0x20] sm:$0xff]
    %v261 = vld [vmem:[#allocation8 + $0x28] sm:$0xff]
    %v262 = vld [vmem:[#allocation8 + $0x30] sm:$0xff]
    %v263 = vld [vmem:[#allocation8 + $0x38] sm:$0xff]
    %v264 = vld [vmem:[#allocation8 + $0x40] sm:$0xff]
    %v265 = vld [vmem:[#allocation8 + $0x48] sm:$0xff]
    %v266 = vld [vmem:[#allocation8 + $0x50] sm:$0xff]
    %v267 = vld [vmem:[#allocation8 + $0x58] sm:$0xff]
    %v268 = vld [vmem:[#allocation8 + $0x60] sm:$0xff]
    %v269 = vld [vmem:[#allocation8 + $0x68] sm:$0xff]
    %v270 = vld [vmem:[#allocation8 + $0x70] sm:$0xff]
    %v271 = vld [vmem:[#allocation8 + $0x78] sm:$0xff]
    %v272 = vld [vmem:[%s6] sm:$0x1]
    %v274 = vlaneseq
    %v275 = vshrl.u32 %v274, 7
    %v276 = vsub.s32 0, %v275
    %v277 = vrot.slane %v272, %v276
    %279 = vmatprep.subr.mxu0 0.0
    %280 = vmatpush1.msra.mxu0 %v256
    %281 = vmatprep.subr.mxu0 0.0
    %282 = vmatpush1.msra.mxu0 %v257
    %283 = vmatprep.subr.mxu0 0.0
    %284 = vmatpush1.msra.mxu0 %v258
    %285 = vmatprep.subr.mxu0 0.0
    %286 = vmatpush1.msra.mxu0 %v259
    %287 = vmatprep.subr.mxu0 0.0
    %288 = vmatpush1.msra.mxu0 %v260
    %289 = vmatprep.subr.mxu0 0.0
    %290 = vmatpush1.msra.mxu0 %v261
    %291 = vmatprep.subr.mxu0 0.0
    %292 = vmatpush1.msra.mxu0 %v262
    %293 = vmatprep.subr.mxu0 0.0
    %294 = vmatpush1.msra.mxu0 %v263
    %295 = vmatprep.subr.mxu0 0.0
    %296 = vmatpush1.msra.mxu0 %v264
    %297 = vmatprep.subr.mxu0 0.0
    %298 = vmatpush1.msra.mxu0 %v265
    %299 = vmatprep.subr.mxu0 0.0
    %300 = vmatpush1.msra.mxu0 %v266
    %301 = vmatprep.subr.mxu0 0.0
    %302 = vmatpush1.msra.mxu0 %v267
    %303 = vmatprep.subr.mxu0 0.0
    %304 = vmatpush1.msra.mxu0 %v268
    %305 = vmatprep.subr.mxu0 0.0
    %306 = vmatpush1.msra.mxu0 %v269
    %307 = vmatprep.subr.mxu0 0.0
    %308 = vmatpush1.msra.mxu0 %v270
    %309 = vmatprep.subr.mxu0 0.0
    %310 = vmatpush1.msra.mxu0 %v271
    %311 = vmatprep.subr.mxu0 0.0
    %312 = vmatpush1.msra.mxu0 0.0
    %313 = vmatprep.subr.mxu0 0.0
    %314 = vmatpush1.msra.mxu0 0.0
    %315 = vmatprep.subr.mxu0 0.0
    %316 = vmatpush1.msra.mxu0 0.0
    %317 = vmatprep.subr.mxu0 0.0
    %318 = vmatpush1.msra.mxu0 0.0
    %319 = vmatprep.subr.mxu0 0.0
    %320 = vmatpush1.msra.mxu0 0.0
    %321 = vmatprep.subr.mxu0 0.0
    %322 = vmatpush1.msra.mxu0 0.0
    %323 = vmatprep.subr.mxu0 0.0
    %324 = vmatpush1.msra.mxu0 0.0
    %325 = vmatprep.subr.mxu0 0.0
    %326 = vmatpush1.msra.mxu0 0.0
    %327 = vmatprep.subr.mxu0 0.0
    %328 = vmatpush1.msra.mxu0 0.0
    %329 = vmatprep.subr.mxu0 0.0
    %330 = vmatpush1.msra.mxu0 0.0
    %331 = vmatprep.subr.mxu0 0.0
    %332 = vmatpush1.msra.mxu0 0.0
    %333 = vmatprep.subr.mxu0 0.0
    %334 = vmatpush1.msra.mxu0 0.0
    %335 = vmatprep.subr.mxu0 0.0
    %336 = vmatpush1.msra.mxu0 0.0
    %337 = vmatprep.subr.mxu0 0.0
    %338 = vmatpush1.msra.mxu0 0.0
    %339 = vmatprep.subr.mxu0 0.0
    %340 = vmatpush1.msra.mxu0 0.0
    %341 = vmatprep.subr.mxu0 0.0
    %342 = vmatpush1.msra.mxu0 0.0
    %343 = vmatprep.mubr.f32.mxu0 0.0
    %344 = vmatmul.mubr.f32.gmra.mrb[0].mxu0 %v255
    %v345 = vpop.f32.mrb[0].mxu0
    %v346 = vadd.f32 %v277, %v345
    %v347 = vpop.f32.mrb[0].mxu0
    %348 = vdwg.mxu0
    %349 = vst [vmem:[#allocation10] sm:$0xff] %v346
    // Predicated region
    $region46: #{tpu_custom_call.1} parent=1 // pred_check
      _
    $region47: #{tpu_custom_call.1} parent=1 // pred_check_branch
      %351 = sbr.rel (0) target = $region49
    $region48: #{tpu_custom_call.1} parent=1 // pred_region
      %s353 = ssub.s32 128, 128
      %354 = vsyncadd [#allocation4], %s353
      %s356 = sshll.u32 [#allocation10], 4
      %s357 = int_to_ptr.vmem [resolvable:$true] %s356
      %359 = dma.vmem_to_hbm [thread:$0]  %s357, 128, %s7, [#allocation4]
    $region49: #{tpu_custom_call.1} parent=1 // pred_fallthru
      _
    // Predicated region
    $region50: #{tpu_custom_call.1} parent=1 // pred_check
      _
    $region51: #{tpu_custom_call.1} parent=1 // pred_check_branch
      %361 = sbr.rel (0) target = $region53
    $region52: #{tpu_custom_call.1} parent=1 // pred_region
      %362 = dma.done [#allocation4], 128
    $region53: #{tpu_custom_call.1} parent=1 // pred_fallthru
      _
    %363 = vsyncpa [#allocation3], 1
    %364 = vsyncpa [#allocation6], 1
    %365 = vsyncpa [#allocation9], 1
    %366 = vsyncpa [#allocation4], 1

// kernel: tpu_custom_call.1
$region0: #{tpu_custom_call.1}
  #allocation0 [shape = 'u32[]', space=smem, size = 0x4, offset = 0x4, fixed_abs, tag = 'smem constant byte address 0x4 - core index']
  #allocation1 [shape = 'u32[144,128]{1,0:T(1,128)}', space=vmem, size = 0x12000, scoped, tag = 'internal scratch']
  %s0 = inlined_call_operand.hbm [shape: f32[8,8], index: 0, kind: input, shape index: {}]
  %s1 = inlined_call_operand.hbm [shape: f32[8,128], index: 1, kind: input, shape index: {}]
  %s2 = inlined_call_operand.vmem [shape: f32[1,128], index: 2, kind: input, shape index: {}]
  %s3 = inlined_call_operand.hbm [shape: f32[128,128], index: 3, kind: input, shape index: {}]
  %s4 = inlined_call_operand.vmem [shape: f32[1,128], index: 4, kind: input, shape index: {}]
  %s5 = inlined_call_operand.hbm [shape: f32[128,128], index: 5, kind: input, shape index: {}]
  %s6 = inlined_call_operand.vmem [shape: f32[1,128], index: 6, kind: input, shape index: {}]
  %s7 = inlined_call_operand.hbm [shape: f32[8,128], index: 7, kind: output, shape index: {}]
  %s8 = sld [smem:[#allocation0]]
  $region54: #{tpu_custom_call.1} parent=0
    _
  %s10 = ssub.s32 1, %s8
  %s11 = scalar_select 0, %s10, %s8
  $region1: #{tpu_custom_call.1} parent=0
    #allocation2 [shape = 'u8[4096]{0}', space=vmem, size = 0x1000, scoped, tag = 'input window, operand 0, single buffered']
    #allocation3 [shape = 's32[1]{0}', space=sflag, size = 0x4, scoped, tag = 'scoped memory for tpu_custom_call.1']
    #allocation4 [shape = 's32[1]{0}', space=sflag, size = 0x4, scoped, tag = 'scoped memory for tpu_custom_call.1']
    #allocation5 [shape = 'u8[4096]{0}', space=vmem, size = 0x1000, scoped, tag = 'input window, operand 1, single buffered']
    #allocation6 [shape = 's32[1]{0}', space=sflag, size = 0x4, scoped, tag = 'scoped memory for tpu_custom_call.1']
    #allocation7 [shape = 'u8[65536]{0}', space=vmem, size = 0x10000, scoped, tag = 'input window, operand 3, single buffered']
    #allocation8 [shape = 'u8[65536]{0}', space=vmem, size = 0x10000, scoped, tag = 'input window, operand 5, single buffered']
    #allocation9 [shape = 's32[1]{0}', space=sflag, size = 0x4, scoped, tag = 'scoped memory for tpu_custom_call.1']
    #allocation10 [shape = 'u8[4096]{0}', space=vmem, size = 0x1000, scoped, tag = 'output window, operand 0, single buffered']
    %12 = vsyncpa [#allocation3], 0
    %13 = vsyncpa [#allocation6], 0
    %14 = vsyncpa [#allocation9], 0
    %15 = vsyncpa [#allocation4], 0
    // Predicated region
    $region2: #{tpu_custom_call.1} parent=1 // pred_check
      _
    $region3: #{tpu_custom_call.1} parent=1 // pred_check_branch
      %17 = sbr.rel (0) target = $region5
    $region4: #{tpu_custom_call.1} parent=1 // pred_region
      %s19 = ssub.s32 128, 128
      %20 = vsyncadd [#allocation3], %s19
      %s22 = sshll.u32 [#allocation2], 4
      %s23 = int_to_ptr.vmem [resolvable:$true] %s22
      %25 = dma.hbm_to_vmem [thread:$0]  %s0, 128, %s23, [#allocation3]
    $region5: #{tpu_custom_call.1} parent=1 // pred_fallthru
      _
    // Predicated region
    $region6: #{tpu_custom_call.1} parent=1 // pred_check
      _
    $region7: #{tpu_custom_call.1} parent=1 // pred_check_branch
      %27 = sbr.rel (0) target = $region9
    $region8: #{tpu_custom_call.1} parent=1 // pred_region
      %s29 = ssub.s32 128, 128
      %30 = vsyncadd [#allocation6], %s29
      %s32 = sshll.u32 [#allocation5], 4
      %s33 = int_to_ptr.vmem [resolvable:$true] %s32
      %35 = dma.hbm_to_vmem [thread:$0]  %s1, 128, %s33, [#allocation6]
    $region9: #{tpu_custom_call.1} parent=1 // pred_fallthru
      _
    // Predicated region
    $region10: #{tpu_custom_call.1} parent=1 // pred_check
      _
    $region11: #{tpu_custom_call.1} parent=1 // pred_check_branch
      %37 = sbr.rel (0) target = $region13
    $region12: #{tpu_custom_call.1} parent=1 // pred_region
      _
    $region13: #{tpu_custom_call.1} parent=1 // pred_fallthru
      _
    // Predicated region
    $region14: #{tpu_custom_call.1} parent=1 // pred_check
      _
    $region15: #{tpu_custom_call.1} parent=1 // pred_check_branch
      %39 = sbr.rel (0) target = $region17
    $region16: #{tpu_custom_call.1} parent=1 // pred_region
      %s41 = ssub.s32 2048, 2048
      %42 = vsyncadd [#allocation6], %s41
      %s43 = sshll.u32 [#allocation7], 4
      %s44 = int_to_ptr.vmem [resolvable:$true] %s43
      %49 = dma.hbm_to_vmem [thread:$0]  %s3, 2048, %s44, [#allocation6], 128, 128, 8
    $region17: #{tpu_custom_call.1} parent=1 // pred_fallthru
      _
    // Predicated region
    $region18: #{tpu_custom_call.1} parent=1 // pred_check
      _
    $region19: #{tpu_custom_call.1} parent=1 // pred_check_branch
      %51 = sbr.rel (0) target = $region21
    $region20: #{tpu_custom_call.1} parent=1 // pred_region
      _
    $region21: #{tpu_custom_call.1} parent=1 // pred_fallthru
      _
    // Predicated region
    $region22: #{tpu_custom_call.1} parent=1 // pred_check
      _
    $region23: #{tpu_custom_call.1} parent=1 // pred_check_branch
      %53 = sbr.rel (0) target = $region25
    $region24: #{tpu_custom_call.1} parent=1 // pred_region
      %s55 = ssub.s32 2048, 2048
      %56 = vsyncadd [#allocation9], %s55
      %s57 = sshll.u32 [#allocation8], 4
      %s58 = int_to_ptr.vmem [resolvable:$true] %s57
      %63 = dma.hbm_to_vmem [thread:$0]  %s5, 2048, %s58, [#allocation9], 128, 128, 8
    $region25: #{tpu_custom_call.1} parent=1 // pred_fallthru
      _
    // Predicated region
    $region26: #{tpu_custom_call.1} parent=1 // pred_check
      _
    $region27: #{tpu_custom_call.1} parent=1 // pred_check_branch
      %65 = sbr.rel (0) target = $region29
    $region28: #{tpu_custom_call.1} parent=1 // pred_region
      _
    $region29: #{tpu_custom_call.1} parent=1 // pred_fallthru
      _
    // Predicated region
    $region30: #{tpu_custom_call.1} parent=1 // pred_check
      _
    $region31: #{tpu_custom_call.1} parent=1 // pred_check_branch
      %67 = sbr.rel (0) target = $region33
    $region32: #{tpu_custom_call.1} parent=1 // pred_region
      %68 = dma.done [#allocation3], 128
    $region33: #{tpu_custom_call.1} parent=1 // pred_fallthru
      _
    // Predicated region
    $region34: #{tpu_custom_call.1} parent=1 // pred_check
      _
    $region35: #{tpu_custom_call.1} parent=1 // pred_check_branch
      %70 = sbr.rel (0) target = $region37
    $region36: #{tpu_custom_call.1} parent=1 // pred_region
      %71 = dma.done [#allocation6], 128
    $region37: #{tpu_custom_call.1} parent=1 // pred_fallthru
      _
    // Predicated region
    $region38: #{tpu_custom_call.1} parent=1 // pred_check
      _
    $region39: #{tpu_custom_call.1} parent=1 // pred_check_branch
      %73 = sbr.rel (0) target = $region41
    $region40: #{tpu_custom_call.1} parent=1 // pred_region
      %74 = dma.done [#allocation6], 2048
    $region41: #{tpu_custom_call.1} parent=1 // pred_fallthru
      _
    // Predicated region
    $region42: #{tpu_custom_call.1} parent=1 // pred_check
      _
    $region43: #{tpu_custom_call.1} parent=1 // pred_check_branch
      %76 = sbr.rel (0) target = $region45
    $region44: #{tpu_custom_call.1} parent=1 // pred_region
      %77 = dma.done [#allocation9], 2048
    $region45: #{tpu_custom_call.1} parent=1 // pred_fallthru
      _
    %v78 = vld [vmem:[#allocation2] sm:$0xff]
    %v79 = vld [vmem:[#allocation5] sm:$0xff]
    %v80 = vld [vmem:[%s2] sm:$0x1]
    %v82 = vlaneseq
    %v83 = vshrl.u32 %v82, 7
    %v84 = vsub.s32 0, %v83
    %v85 = vrot.slane %v80, %v84
    %vm87 = vcmask 64512
    %v89 = vsel %vm87, %v78, 0
    %91 = vmatprep.subr.mxu0 0.0
    %92 = vmatpush1.msra.mxu0 %v79
    %93 = vmatprep.subr.mxu0 0.0
    %94 = vmatpush1.msra.mxu0 0.0
    %95 = vmatprep.subr.mxu0 0.0
    %96 = vmatpush1.msra.mxu0 0.0
    %97 = vmatprep.subr.mxu0 0.0
    %98 = vmatpush1.msra.mxu0 0.0
    %99 = vmatprep.subr.mxu0 0.0
    %100 = vmatpush1.msra.mxu0 0.0
    %101 = vmatprep.subr.mxu0 0.0
    %102 = vmatpush1.msra.mxu0 0.0
    %103 = vmatprep.subr.mxu0 0.0
    %104 = vmatpush1.msra.mxu0 0.0
    %105 = vmatprep.subr.mxu0 0.0
    %106 = vmatpush1.msra.mxu0 0.0
    %107 = vmatprep.subr.mxu0 0.0
    %108 = vmatpush1.msra.mxu0 0.0
    %109 = vmatprep.subr.mxu0 0.0
    %110 = vmatpush1.msra.mxu0 0.0
    %111 = vmatprep.subr.mxu0 0.0
    %112 = vmatpush1.msra.mxu0 0.0
    %113 = vmatprep.subr.mxu0 0.0
    %114 = vmatpush1.msra.mxu0 0.0
    %115 = vmatprep.subr.mxu0 0.0
    %116 = vmatpush1.msra.mxu0 0.0
    %117 = vmatprep.subr.mxu0 0.0
    %118 = vmatpush1.msra.mxu0 0.0
    %119 = vmatprep.subr.mxu0 0.0
    %120 = vmatpush1.msra.mxu0 0.0
    %121 = vmatprep.subr.mxu0 0.0
    %122 = vmatpush1.msra.mxu0 0.0
    %123 = vmatprep.subr.mxu0 0.0
    %124 = vmatpush1.msra.mxu0 0.0
    %125 = vmatprep.subr.mxu0 0.0
    %126 = vmatpush1.msra.mxu0 0.0
    %127 = vmatprep.subr.mxu0 0.0
    %128 = vmatpush1.msra.mxu0 0.0
    %129 = vmatprep.subr.mxu0 0.0
    %130 = vmatpush1.msra.mxu0 0.0
    %131 = vmatprep.subr.mxu0 0.0
    %132 = vmatpush1.msra.mxu0 0.0
    %133 = vmatprep.subr.mxu0 0.0
    %134 = vmatpush1.msra.mxu0 0.0
    %135 = vmatprep.subr.mxu0 0.0
    %136 = vmatpush1.msra.mxu0 0.0
    %137 = vmatprep.subr.mxu0 0.0
    %138 = vmatpush1.msra.mxu0 0.0
    %139 = vmatprep.subr.mxu0 0.0
    %140 = vmatpush1.msra.mxu0 0.0
    %141 = vmatprep.subr.mxu0 0.0
    %142 = vmatpush1.msra.mxu0 0.0
    %143 = vmatprep.subr.mxu0 0.0
    %144 = vmatpush1.msra.mxu0 0.0
    %145 = vmatprep.subr.mxu0 0.0
    %146 = vmatpush1.msra.mxu0 0.0
    %147 = vmatprep.subr.mxu0 0.0
    %148 = vmatpush1.msra.mxu0 0.0
    %149 = vmatprep.subr.mxu0 0.0
    %150 = vmatpush1.msra.mxu0 0.0
    %151 = vmatprep.subr.mxu0 0.0
    %152 = vmatpush1.msra.mxu0 0.0
    %153 = vmatprep.subr.mxu0 0.0
    %154 = vmatpush1.msra.mxu0 0.0
    %155 = vmatprep.mubr.f32.mxu0 0.0
    %156 = vmatmul.mubr.f32.gmra.mrb[0].mxu0 %v89
    %v157 = vpop.f32.mrb[0].mxu0
    %v158 = vadd.f32 %v85, %v157
    %v159 = vpop.f32.mrb[0].mxu0
    %160 = vdwg.mxu0
    %v161 = vmax.f32 %v158, 0.0
    %v162 = vld [vmem:[#allocation7] sm:$0xff]
    %v163 = vld [vmem:[#allocation7 + $0x8] sm:$0xff]
    %v164 = vld [vmem:[#allocation7 + $0x10] sm:$0xff]
    %v165 = vld [vmem:[#allocation7 + $0x18] sm:$0xff]
    %v166 = vld [vmem:[#allocation7 + $0x20] sm:$0xff]
    %v167 = vld [vmem:[#allocation7 + $0x28] sm:$0xff]
    %v168 = vld [vmem:[#allocation7 + $0x30] sm:$0xff]
    %v169 = vld [vmem:[#allocation7 + $0x38] sm:$0xff]
    %v170 = vld [vmem:[#allocation7 + $0x40] sm:$0xff]
    %v171 = vld [vmem:[#allocation7 + $0x48] sm:$0xff]
    %v172 = vld [vmem:[#allocation7 + $0x50] sm:$0xff]
    %v173 = vld [vmem:[#allocation7 + $0x58] sm:$0xff]
    %v174 = vld [vmem:[#allocation7 + $0x60] sm:$0xff]
    %v175 = vld [vmem:[#allocation7 + $0x68] sm:$0xff]
    %v176 = vld [vmem:[#allocation7 + $0x70] sm:$0xff]
    %v177 = vld [vmem:[#allocation7 + $0x78] sm:$0xff]
    %v178 = vld [vmem:[%s4] sm:$0x1]
    %v180 = vlaneseq
    %v181 = vshrl.u32 %v180, 7
    %v182 = vsub.s32 0, %v181
    %v183 = vrot.slane %v178, %v182
    %185 = vmatprep.subr.mxu0 0.0
    %186 = vmatpush1.msra.mxu0 %v162
    %187 = vmatprep.subr.mxu0 0.0
    %188 = vmatpush1.msra.mxu0 %v163
    %189 = vmatprep.subr.mxu0 0.0
    %190 = vmatpush1.msra.mxu0 %v164
    %191 = vmatprep.subr.mxu0 0.0
    %192 = vmatpush1.msra.mxu0 %v165
    %193 = vmatprep.subr.mxu0 0.0
    %194 = vmatpush1.msra.mxu0 %v166
    %195 = vmatprep.subr.mxu0 0.0
    %196 = vmatpush1.msra.mxu0 %v167
    %197 = vmatprep.subr.mxu0 0.0
    %198 = vmatpush1.msra.mxu0 %v168
    %199 = vmatprep.subr.mxu0 0.0
    %200 = vmatpush1.msra.mxu0 %v169
    %201 = vmatprep.subr.mxu0 0.0
    %202 = vmatpush1.msra.mxu0 %v170
    %203 = vmatprep.subr.mxu0 0.0
    %204 = vmatpush1.msra.mxu0 %v171
    %205 = vmatprep.subr.mxu0 0.0
    %206 = vmatpush1.msra.mxu0 %v172
    %207 = vmatprep.subr.mxu0 0.0
    %208 = vmatpush1.msra.mxu0 %v173
    %209 = vmatprep.subr.mxu0 0.0
    %210 = vmatpush1.msra.mxu0 %v174
    %211 = vmatprep.subr.mxu0 0.0
    %212 = vmatpush1.msra.mxu0 %v175
    %213 = vmatprep.subr.mxu0 0.0
    %214 = vmatpush1.msra.mxu0 %v176
    %215 = vmatprep.subr.mxu0 0.0
    %216 = vmatpush1.msra.mxu0 %v177
    %217 = vmatprep.subr.mxu0 0.0
    %218 = vmatpush1.msra.mxu0 0.0
    %219 = vmatprep.subr.mxu0 0.0
    %220 = vmatpush1.msra.mxu0 0.0
    %221 = vmatprep.subr.mxu0 0.0
    %222 = vmatpush1.msra.mxu0 0.0
    %223 = vmatprep.subr.mxu0 0.0
    %224 = vmatpush1.msra.mxu0 0.0
    %225 = vmatprep.subr.mxu0 0.0
    %226 = vmatpush1.msra.mxu0 0.0
    %227 = vmatprep.subr.mxu0 0.0
    %228 = vmatpush1.msra.mxu0 0.0
    %229 = vmatprep.subr.mxu0 0.0
    %230 = vmatpush1.msra.mxu0 0.0
    %231 = vmatprep.subr.mxu0 0.0
    %232 = vmatpush1.msra.mxu0 0.0
    %233 = vmatprep.subr.mxu0 0.0
    %234 = vmatpush1.msra.mxu0 0.0
    %235 = vmatprep.subr.mxu0 0.0
    %236 = vmatpush1.msra.mxu0 0.0
    %237 = vmatprep.subr.mxu0 0.0
    %238 = vmatpush1.msra.mxu0 0.0
    %239 = vmatprep.subr.mxu0 0.0
    %240 = vmatpush1.msra.mxu0 0.0
    %241 = vmatprep.subr.mxu0 0.0
    %242 = vmatpush1.msra.mxu0 0.0
    %243 = vmatprep.subr.mxu0 0.0
    %244 = vmatpush1.msra.mxu0 0.0
    %245 = vmatprep.subr.mxu0 0.0
    %246 = vmatpush1.msra.mxu0 0.0
    %247 = vmatprep.subr.mxu0 0.0
    %248 = vmatpush1.msra.mxu0 0.0
    %249 = vmatprep.mubr.f32.mxu0 0.0
    %250 = vmatmul.mubr.f32.gmra.mrb[0].mxu0 %v161
    %v251 = vpop.f32.mrb[0].mxu0
    %v252 = vadd.f32 %v183, %v251
    %v253 = vpop.f32.mrb[0].mxu0
    %254 = vdwg.mxu0
    %v255 = vmax.f32 %v252, 0.0
    %v256 = vld [vmem:[#allocation8] sm:$0xff]
    %v257 = vld [vmem:[#allocation8 + $0x8] sm:$0xff]
    %v258 = vld [vmem:[#allocation8 + $0x10] sm:$0xff]
    %v259 = vld [vmem:[#allocation8 + $0x18] sm:$0xff]
    %v260 = vld [vmem:[#allocation8 + $0x20] sm:$0xff]
    %v261 = vld [vmem:[#allocation8 + $0x28] sm:$0xff]
    %v262 = vld [vmem:[#allocation8 + $0x30] sm:$0xff]
    %v263 = vld [vmem:[#allocation8 + $0x38] sm:$0xff]
    %v264 = vld [vmem:[#allocation8 + $0x40] sm:$0xff]
    %v265 = vld [vmem:[#allocation8 + $0x48] sm:$0xff]
    %v266 = vld [vmem:[#allocation8 + $0x50] sm:$0xff]
    %v267 = vld [vmem:[#allocation8 + $0x58] sm:$0xff]
    %v268 = vld [vmem:[#allocation8 + $0x60] sm:$0xff]
    %v269 = vld [vmem:[#allocation8 + $0x68] sm:$0xff]
    %v270 = vld [vmem:[#allocation8 + $0x70] sm:$0xff]
    %v271 = vld [vmem:[#allocation8 + $0x78] sm:$0xff]
    %v272 = vld [vmem:[%s6] sm:$0x1]
    %v274 = vlaneseq
    %v275 = vshrl.u32 %v274, 7
    %v276 = vsub.s32 0, %v275
    %v277 = vrot.slane %v272, %v276
    %279 = vmatprep.subr.mxu0 0.0
    %280 = vmatpush1.msra.mxu0 %v256
    %281 = vmatprep.subr.mxu0 0.0
    %282 = vmatpush1.msra.mxu0 %v257
    %283 = vmatprep.subr.mxu0 0.0
    %284 = vmatpush1.msra.mxu0 %v258
    %285 = vmatprep.subr.mxu0 0.0
    %286 = vmatpush1.msra.mxu0 %v259
    %287 = vmatprep.subr.mxu0 0.0
    %288 = vmatpush1.msra.mxu0 %v260
    %289 = vmatprep.subr.mxu0 0.0
    %290 = vmatpush1.msra.mxu0 %v261
    %291 = vmatprep.subr.mxu0 0.0
    %292 = vmatpush1.msra.mxu0 %v262
    %293 = vmatprep.subr.mxu0 0.0
    %294 = vmatpush1.msra.mxu0 %v263
    %295 = vmatprep.subr.mxu0 0.0
    %296 = vmatpush1.msra.mxu0 %v264
    %297 = vmatprep.subr.mxu0 0.0
    %298 = vmatpush1.msra.mxu0 %v265
    %299 = vmatprep.subr.mxu0 0.0
    %300 = vmatpush1.msra.mxu0 %v266
    %301 = vmatprep.subr.mxu0 0.0
    %302 = vmatpush1.msra.mxu0 %v267
    %303 = vmatprep.subr.mxu0 0.0
    %304 = vmatpush1.msra.mxu0 %v268
    %305 = vmatprep.subr.mxu0 0.0
    %306 = vmatpush1.msra.mxu0 %v269
    %307 = vmatprep.subr.mxu0 0.0
    %308 = vmatpush1.msra.mxu0 %v270
    %309 = vmatprep.subr.mxu0 0.0
    %310 = vmatpush1.msra.mxu0 %v271
    %311 = vmatprep.subr.mxu0 0.0
    %312 = vmatpush1.msra.mxu0 0.0
    %313 = vmatprep.subr.mxu0 0.0
    %314 = vmatpush1.msra.mxu0 0.0
    %315 = vmatprep.subr.mxu0 0.0
    %316 = vmatpush1.msra.mxu0 0.0
    %317 = vmatprep.subr.mxu0 0.0
    %318 = vmatpush1.msra.mxu0 0.0
    %319 = vmatprep.subr.mxu0 0.0
    %320 = vmatpush1.msra.mxu0 0.0
    %321 = vmatprep.subr.mxu0 0.0
    %322 = vmatpush1.msra.mxu0 0.0
    %323 = vmatprep.subr.mxu0 0.0
    %324 = vmatpush1.msra.mxu0 0.0
    %325 = vmatprep.subr.mxu0 0.0
    %326 = vmatpush1.msra.mxu0 0.0
    %327 = vmatprep.subr.mxu0 0.0
    %328 = vmatpush1.msra.mxu0 0.0
    %329 = vmatprep.subr.mxu0 0.0
    %330 = vmatpush1.msra.mxu0 0.0
    %331 = vmatprep.subr.mxu0 0.0
    %332 = vmatpush1.msra.mxu0 0.0
    %333 = vmatprep.subr.mxu0 0.0
    %334 = vmatpush1.msra.mxu0 0.0
    %335 = vmatprep.subr.mxu0 0.0
    %336 = vmatpush1.msra.mxu0 0.0
    %337 = vmatprep.subr.mxu0 0.0
    %338 = vmatpush1.msra.mxu0 0.0
    %339 = vmatprep.subr.mxu0 0.0
    %340 = vmatpush1.msra.mxu0 0.0
    %341 = vmatprep.subr.mxu0 0.0
    %342 = vmatpush1.msra.mxu0 0.0
    %343 = vmatprep.mubr.f32.mxu0 0.0
    %344 = vmatmul.mubr.f32.gmra.mrb[0].mxu0 %v255
    %v345 = vpop.f32.mrb[0].mxu0
    %v346 = vadd.f32 %v277, %v345
    %v347 = vpop.f32.mrb[0].mxu0
    %348 = vdwg.mxu0
    %349 = vst [vmem:[#allocation10] sm:$0xff] %v346
    // Predicated region
    $region46: #{tpu_custom_call.1} parent=1 // pred_check
      _
    $region47: #{tpu_custom_call.1} parent=1 // pred_check_branch
      %351 = sbr.rel (0) target = $region49
    $region48: #{tpu_custom_call.1} parent=1 // pred_region
      %s353 = ssub.s32 128, 128
      %354 = vsyncadd [#allocation4], %s353
      %s356 = sshll.u32 [#allocation10], 4
      %s357 = int_to_ptr.vmem [resolvable:$true] %s356
      %359 = dma.vmem_to_hbm [thread:$0]  %s357, 128, %s7, [#allocation4]
    $region49: #{tpu_custom_call.1} parent=1 // pred_fallthru
      _
    // Predicated region
    $region50: #{tpu_custom_call.1} parent=1 // pred_check
      _
    $region51: #{tpu_custom_call.1} parent=1 // pred_check_branch
      %361 = sbr.rel (0) target = $region53
    $region52: #{tpu_custom_call.1} parent=1 // pred_region
      %362 = dma.done [#allocation4], 128
    $region53: #{tpu_custom_call.1} parent=1 // pred_fallthru
      _
    %363 = vsyncpa [#allocation3], 1
    %364 = vsyncpa [#allocation6], 1
    %365 = vsyncpa [#allocation9], 1
    %366 = vsyncpa [#allocation4], 1

</llo_original>
